<compile_context>
chip_gen: v7x
topology: tpu7x:2x2x1
jax: 0.10.0
libtpu: 0.0.40
codegen_flags: <defaults>
</compile_context>

<pallas_src>
import functools

import jax
import jax.numpy as jnp
from jax.experimental import pallas as pl
from jax.experimental.pallas import tpu as pltpu

_LANES = 128
_MIX_A = 0x9E3779B1     # seed mixing constant
_MIX_B = 0x85EBCA77     # feature mixing constant (hoisted into a resident input)
_FIN_1 = 0x85EBCA6B     # murmur3 finalizer constants
_FIN_2 = 0xC2B2AE35
_NEG_ZERO_BITS = 0x80000000


def _round_up(x, m):
    return (x + m - 1) // m * m


def _pick_tile(n_rows, target_rows):
    """Row tile: multiple of 8, <= problem size, and keep a multi-step grid."""
    tile = _round_up(max(int(target_rows), 8), 8)
    tile = min(tile, _round_up(n_rows, 8))
    # Keep >= ~4 grid steps when the problem is big enough so the "parallel"
    # axis can be sharded across TensorCores (v7x megacore).
    quarter = _round_up(pl.cdiv(n_rows, 4), 8)
    tile = min(tile, max(quarter, 8))
    return max(tile, 8)


def _premix(seed_bits):
    """Canonicalize -0.0 -> +0.0 and fold in the seed mixing constant (narrow)."""
    seed_bits = jnp.where(seed_bits == jnp.uint32(_NEG_ZERO_BITS),
                          jnp.uint32(0), seed_bits)
    return seed_bits * jnp.uint32(_MIX_A)


def _finalize_uniform(h, scale):
    """murmur3-style finalizer -> uniform [0, rand_range); scale pre-folded."""
    h = h ^ (h >> jnp.uint32(16))
    h = h * jnp.uint32(_FIN_1)
    h = h ^ (h >> jnp.uint32(13))
    h = h * jnp.uint32(_FIN_2)
    h = h ^ (h >> jnp.uint32(16))
    # top 24 bits -> [0,1) -> [0, rand_range)
    return (h >> jnp.uint32(8)).astype(jnp.float32) * jnp.float32(scale)


# ---------------------------------------------------------------------------
# Lane-dense kernel for F < 128 (G = 128 // F seeds packed per 128-lane row).
#   seed_ref  : (tile, G)    f32   column g = seed of logical row r*G + g
#   const_ref : (2, 128)     u32   row0 = (lane % F + 1)*MIX_B, row1 = lane//F
#   w_ref     : (128, 128)   f32   block-diag(G copies of W^T)
#   b_ref     : (1, 128)     f32   bias tiled G times
#   o_ref     : (tile, 128)  f32   lane l of row r = Linear(emb)[r*G + l//F, l%F]
# ---------------------------------------------------------------------------
def _packed_kernel(seed_ref, const_ref, w_ref, b_ref, o_ref, *, n_groups, scale):
    G = n_groups
    fm = const_ref[0:1, :]                               # (1, 128) feature mix
    gid = const_ref[1:2, :]                              # (1, 128) lane -> group

    bits = pltpu.bitcast(seed_ref[...], jnp.uint32)      # (tile, G)
    h0 = _premix(bits)                                   # (tile, G)

    # Replicate column g across its F-lane group with VPU selects only; the
    # compares run on the resident (1,128) group-id row (no full-width iota).
    rep = h0[:, G - 1:G]                                 # (tile, 1)
    for g in range(G - 2, -1, -1):
        rep = jnp.where(gid <= jnp.uint32(g), h0[:, g:g + 1], rep)

    emb = _finalize_uniform(rep + fm, scale)             # (tile, 128)

    # Block-diagonal weight applies the (F,F) Linear to every lane group.
    o_ref[...] = (
        jnp.dot(emb.astype(w_ref.dtype), w_ref[...],
                preferred_element_type=jnp.float32)
        + b_ref[...]
    )


# ---------------------------------------------------------------------------
# Plain kernel (any F; used when F >= 128 or 128 % F != 0).
# ---------------------------------------------------------------------------
def _plain_kernel(x_ref, fm_ref, w_ref, b_ref, o_ref, *, scale):
    bits = pltpu.bitcast(x_ref[...], jnp.uint32)         # (tile, 1)
    h0 = _premix(bits)                                   # (tile, 1) narrow premix
    emb = _finalize_uniform(h0 + fm_ref[...], scale)     # (tile, F)
    o_ref[...] = (
        jnp.dot(emb.astype(w_ref.dtype), w_ref[...],
                preferred_element_type=jnp.float32)
        + b_ref[...]
    )


def _forward_packed(x_flat, feat_mix, w_t, b_row, N, F, scale, target_rows):
    G = _LANES // F                           # seeds per 128-lane output row
    n_dense = pl.cdiv(N, G)                   # exact dense row count
    pad = n_dense * G - N
    if pad:
        # Tiny (< G elements) seed-side pad so the (n_dense, G) reshape is legal.
        x_flat = jnp.concatenate([x_flat, jnp.zeros((pad,), jnp.float32)])
    seeds2d = x_flat.reshape(n_dense, G)

    lane = jnp.arange(_LANES, dtype=jnp.uint32)
    consts = jnp.stack([jnp.tile(feat_mix, G),           # per-lane feature mix
                        lane // jnp.uint32(F)])          # per-lane group id
    w_bd = jnp.kron(jnp.eye(G, dtype=jnp.float32), w_t)  # (128, 128) block-diag
    b_tiled = jnp.tile(b_row, (1, G))                    # (1, 128)

    tile = _pick_tile(n_dense, target_rows)
    kernel = functools.partial(_packed_kernel, n_groups=G, scale=scale)

    out = pl.pallas_call(
        kernel,
        out_shape=jax.ShapeDtypeStruct((n_dense, _LANES), jnp.float32),
        grid_spec=pltpu.PrefetchScalarGridSpec(
            num_scalar_prefetch=0,
            grid=(pl.cdiv(n_dense, tile),),
            in_specs=[
                pl.BlockSpec((tile, G), lambda i: (i, 0)),          # seeds
                pl.BlockSpec((2, _LANES), lambda i: (0, 0)),        # fm + group id
                pl.BlockSpec((_LANES, _LANES), lambda i: (0, 0)),   # block-diag W^T
                pl.BlockSpec((1, _LANES), lambda i: (0, 0)),        # bias
            ],
            out_specs=pl.BlockSpec((tile, _LANES), lambda i: (i, 0)),
        ),
        compiler_params=pltpu.CompilerParams(
            dimension_semantics=("parallel",),
        ),
    )(seeds2d, consts, w_bd, b_tiled)

    out = out.reshape(n_dense * G, F)
    if pad:
        out = out[:N]   # only when N % G != 0 (at most G-1 extra logical rows)
    return out


def _forward_plain(x_flat, feat_mix, w_t, b_row, N, F, scale, target_rows):
    # Keep the per-step output tile around ~4 MiB.
    row_cap = max(8, (4 << 20) // (4 * F))
    tile = _pick_tile(N, min(int(target_rows), row_cap))
    x_col = x_flat.reshape(N, 1)
    fm_row = feat_mix.reshape(1, F)

    kernel = functools.partial(_plain_kernel, scale=scale)
    out = pl.pallas_call(
        kernel,
        out_shape=jax.ShapeDtypeStruct((N, F), jnp.float32),
        grid_spec=pltpu.PrefetchScalarGridSpec(
            num_scalar_prefetch=0,
            grid=(pl.cdiv(N, tile),),
            in_specs=[
                pl.BlockSpec((tile, 1), lambda i: (i, 0)),   # seeds
                pl.BlockSpec((1, F), lambda i: (0, 0)),      # feat mix (resident)
                pl.BlockSpec((F, F), lambda i: (0, 0)),      # weight (resident)
                pl.BlockSpec((1, F), lambda i: (0, 0)),      # bias (resident)
            ],
            out_specs=pl.BlockSpec((tile, F), lambda i: (i, 0)),
        ),
        compiler_params=pltpu.CompilerParams(
            dimension_semantics=("parallel",),
        ),
    )(x_col, fm_row, w_t, b_row)
    return out


def float_embedding_forward(x, w, b, *, rand_range=100.0, block_rows=2048,
                            use_bf16_matmul=False):
    """FloatEmbedding forward.

    x: (B, S) f32 scalar seeds; w: (F, F) Linear weight (PyTorch out x in
    layout); b: (F,) bias.  Returns (B, S, F) f32.
    """
    B, S = x.shape
    F = w.shape[0]
    N = B * S
    scale = float(rand_range) / float(1 << 24)

    x_flat = jnp.asarray(x, jnp.float32).reshape(N)
    feat = jnp.arange(F, dtype=jnp.uint32)
    feat_mix = (feat + jnp.uint32(1)) * jnp.uint32(_MIX_B)      # (F,) u32, resident
    w_t = jnp.asarray(w, jnp.float32).T                          # emb @ w_t == Linear(emb)
    b_row = jnp.asarray(b, jnp.float32).reshape(1, F)

    if F < _LANES and _LANES % F == 0 and F >= 8:
        # Lane-dense packed path (VALU-bound; keep f32 weights).
        out2d = _forward_packed(x_flat, feat_mix, w_t, b_row, N, F, scale, block_rows)
    else:
        if use_bf16_matmul:
            # v6e/v7x native bf16 MXU: 2-3x on the matmul-bound regime,
            # ~1e-3 relative error vs the f32 reference.
            w_t = w_t.astype(jnp.bfloat16)
        out2d = _forward_plain(x_flat, feat_mix, w_t, b_row, N, F, scale, block_rows)
    return out2d.reshape(B, S, F)


def _reference_forward(x, w, b, *, rand_range=100.0):
    """Pure-JAX reference of the kernel's hash + Linear semantics."""
    B, S = x.shape
    F = w.shape[0]
    seeds = jnp.asarray(x, jnp.float32).reshape(-1)
    bits = jax.lax.bitcast_convert_type(seeds, jnp.uint32)
    bits = jnp.where(bits == jnp.uint32(_NEG_ZERO_BITS), jnp.uint32(0), bits)
    feat_mix = (jnp.arange(F, dtype=jnp.uint32) + jnp.uint32(1)) * jnp.uint32(_MIX_B)
    h = bits[:, None] * jnp.uint32(_MIX_A) + feat_mix[None, :]
    h = h ^ (h >> jnp.uint32(16))
    h = h * jnp.uint32(_FIN_1)
    h = h ^ (h >> jnp.uint32(13))
    h = h * jnp.uint32(_FIN_2)
    h = h ^ (h >> jnp.uint32(16))
    emb = (h >> jnp.uint32(8)).astype(jnp.float32) * jnp.float32(
        float(rand_range) / float(1 << 24))
    out = emb @ jnp.asarray(w, jnp.float32).T + jnp.asarray(b, jnp.float32)[None, :]
    return out.reshape(B, S, F)


if __name__ == "__main__":
    key = jax.random.PRNGKey(0)
    kx, kw, kb = jax.random.split(key, 3)
    rand_range = 100.0

    # ---- Packed lane-dense path: batch=2, seq=8, n_features=32 ----
    B, S, F = 2, 8, 32
    x = jax.random.uniform(kx, (B, S), jnp.float32, minval=-5.0, maxval=5.0)
    # Plant the same seed at two positions (different rows AND different lane
    # groups) to exercise the "same seed -> same embedding" contract.
    x = x.at[1, 5].set(x[0, 2])
    bound = 1.0 / float(F) ** 0.5
    w = jax.random.uniform(kw, (F, F), jnp.float32, minval=-bound, maxval=bound)
    b = jax.random.uniform(kb, (F,), jnp.float32, minval=-bound, maxval=bound)

    out = jax.block_until_ready(
        float_embedding_forward(x, w, b, rand_range=rand_range))
    assert out.shape == (B, S, F), out.shape
    assert out.dtype == jnp.float32, out.dtype

    # Numerics vs the pure-JAX reference (tolerance allows for reduced-precision
    # MXU passes on the f32 matmul).
    ref = _reference_forward(x, w, b, rand_range=rand_range)
    assert bool(jnp.allclose(out, ref, rtol=3e-2, atol=2.0)), \
        float(jnp.max(jnp.abs(out - ref)))

    # Determinism: same inputs -> identical outputs.
    out2 = jax.block_until_ready(
        float_embedding_forward(x, w, b, rand_range=rand_range))
    assert bool(jnp.all(out == out2))
    # Same seed value -> same embedding row, independent of position/lane group.
    assert bool(jnp.allclose(out[0, 2], out[1, 5]))

    # ---- Plain path (F >= 128): batch=2, seq=4, n_features=128 ----
    F2 = 128
    x2 = jax.random.uniform(kx, (2, 4), jnp.float32, minval=-5.0, maxval=5.0)
    bound2 = 1.0 / float(F2) ** 0.5
    w2 = jax.random.uniform(kw, (F2, F2), jnp.float32, minval=-bound2, maxval=bound2)
    b2 = jax.random.uniform(kb, (F2,), jnp.float32, minval=-bound2, maxval=bound2)
    out_p = jax.block_until_ready(
        float_embedding_forward(x2, w2, b2, rand_range=rand_range))
    ref_p = _reference_forward(x2, w2, b2, rand_range=rand_range)
    assert out_p.shape == (2, 4, F2), out_p.shape
    assert bool(jnp.allclose(out_p, ref_p, rtol=3e-2, atol=2.0)), \
        float(jnp.max(jnp.abs(out_p - ref_p)))

    print("KERNEL_OK")
</pallas_src>

<mosaic_0001>
module attributes {stable_mosaic.version = 11 : i64} {
  func.func @_packed_kernel(%arg0: i32, %arg1: memref<8x4xf32, #tpu.memory_space<vmem>>, %arg2: memref<2x128xi32, #tpu.memory_space<vmem>>, %arg3: memref<128x128xf32, #tpu.memory_space<vmem>>, %arg4: memref<1x128xf32, #tpu.memory_space<vmem>>, %arg5: memref<8x128xf32, #tpu.memory_space<vmem>>) attributes {dimension_semantics = [#tpu.dimension_semantics<parallel>], iteration_bounds = array<i64: 1>, scalar_prefetch = 0 : i64, scratch_operands = 0 : i64, tpu.core_type = #tpu.core_type<tc>, window_params = [{transform_indices = @transform_0, window_bounds = array<i64: 8, 4>}, {pipeline_mode = #tpu.pipeline_mode<synchronous>, transform_indices = @transform_1, window_bounds = array<i64: 2, 128>}, {pipeline_mode = #tpu.pipeline_mode<synchronous>, transform_indices = @transform_2, window_bounds = array<i64: 128, 128>}, {pipeline_mode = #tpu.pipeline_mode<synchronous>, transform_indices = @transform_3, window_bounds = array<i64: 1, 128>}, {transform_indices = @transform_4, window_bounds = array<i64: 8, 128>}]} {
    %c0 = arith.constant 0 : index
    %c0_0 = arith.constant 0 : index
    %0 = vector.load %arg2[%c0, %c0_0] : memref<2x128xi32, #tpu.memory_space<vmem>>, vector<1x128xi32>
    %c1 = arith.constant 1 : index
    %c0_1 = arith.constant 0 : index
    %1 = vector.load %arg2[%c1, %c0_1] : memref<2x128xi32, #tpu.memory_space<vmem>>, vector<1x128xi32>
    %c0_2 = arith.constant 0 : index
    %c0_3 = arith.constant 0 : index
    %2 = vector.load %arg1[%c0_2, %c0_3] : memref<8x4xf32, #tpu.memory_space<vmem>>, vector<8x4xf32>
    %3 = tpu.bitcast %2 : vector<8x4xf32> -> vector<8x4xi32>
    %c-2147483648_i32 = arith.constant -2147483648 : i32
    %4 = vector.broadcast %c-2147483648_i32 : i32 to vector<8x4xi32>
    %5 = arith.cmpi eq, %3, %4 : vector<8x4xi32>
    %c0_i32 = arith.constant 0 : i32
    %6 = vector.broadcast %c0_i32 : i32 to vector<8x4xi32>
    %7 = arith.select %5, %6, %3 : vector<8x4xi1>, vector<8x4xi32>
    %c-1640531535_i32 = arith.constant -1640531535 : i32
    %8 = vector.broadcast %c-1640531535_i32 : i32 to vector<8x4xi32>
    %9 = arith.muli %7, %8 : vector<8x4xi32>
    %10 = vector.extract_strided_slice %9 {offsets = [0, 3], sizes = [8, 1], strides = [1, 1]} : vector<8x4xi32> to vector<8x1xi32>
    %c2_i32 = arith.constant 2 : i32
    %11 = vector.broadcast %c2_i32 : i32 to vector<1x128xi32>
    %12 = arith.cmpi ule, %1, %11 : vector<1x128xi32>
    %13 = vector.extract_strided_slice %9 {offsets = [0, 2], sizes = [8, 1], strides = [1, 1]} : vector<8x4xi32> to vector<8x1xi32>
    %14 = vector.shape_cast %12 : vector<1x128xi1> to vector<1x128xi1>
    %15 = vector.broadcast %14 : vector<1x128xi1> to vector<8x128xi1>
    %16 = vector.shape_cast %13 : vector<8x1xi32> to vector<8x1xi32>
    %17 = vector.broadcast %16 : vector<8x1xi32> to vector<8x128xi32>
    %18 = vector.shape_cast %10 : vector<8x1xi32> to vector<8x1xi32>
    %19 = vector.broadcast %18 : vector<8x1xi32> to vector<8x128xi32>
    %20 = arith.select %15, %17, %19 : vector<8x128xi1>, vector<8x128xi32>
    %c1_i32 = arith.constant 1 : i32
    %21 = vector.broadcast %c1_i32 : i32 to vector<1x128xi32>
    %22 = arith.cmpi ule, %1, %21 : vector<1x128xi32>
    %23 = vector.extract_strided_slice %9 {offsets = [0, 1], sizes = [8, 1], strides = [1, 1]} : vector<8x4xi32> to vector<8x1xi32>
    %24 = vector.shape_cast %22 : vector<1x128xi1> to vector<1x128xi1>
    %25 = vector.broadcast %24 : vector<1x128xi1> to vector<8x128xi1>
    %26 = vector.shape_cast %23 : vector<8x1xi32> to vector<8x1xi32>
    %27 = vector.broadcast %26 : vector<8x1xi32> to vector<8x128xi32>
    %28 = arith.select %25, %27, %20 : vector<8x128xi1>, vector<8x128xi32>
    %c0_i32_4 = arith.constant 0 : i32
    %29 = vector.broadcast %c0_i32_4 : i32 to vector<1x128xi32>
    %30 = arith.cmpi ule, %1, %29 : vector<1x128xi32>
    %31 = vector.extract_strided_slice %9 {offsets = [0, 0], sizes = [8, 1], strides = [1, 1]} : vector<8x4xi32> to vector<8x1xi32>
    %32 = vector.shape_cast %30 : vector<1x128xi1> to vector<1x128xi1>
    %33 = vector.broadcast %32 : vector<1x128xi1> to vector<8x128xi1>
    %34 = vector.shape_cast %31 : vector<8x1xi32> to vector<8x1xi32>
    %35 = vector.broadcast %34 : vector<8x1xi32> to vector<8x128xi32>
    %36 = arith.select %33, %35, %28 : vector<8x128xi1>, vector<8x128xi32>
    %37 = vector.broadcast %0 : vector<1x128xi32> to vector<8x128xi32>
    %38 = arith.addi %36, %37 : vector<8x128xi32>
    %c16_i32 = arith.constant 16 : i32
    %39 = vector.broadcast %c16_i32 : i32 to vector<8x128xi32>
    %40 = arith.shrui %38, %39 : vector<8x128xi32>
    %41 = arith.xori %38, %40 : vector<8x128xi32>
    %c-2048144789_i32 = arith.constant -2048144789 : i32
    %42 = vector.broadcast %c-2048144789_i32 : i32 to vector<8x128xi32>
    %43 = arith.muli %41, %42 : vector<8x128xi32>
    %c13_i32 = arith.constant 13 : i32
    %44 = vector.broadcast %c13_i32 : i32 to vector<8x128xi32>
    %45 = arith.shrui %43, %44 : vector<8x128xi32>
    %46 = arith.xori %43, %45 : vector<8x128xi32>
    %c-1028477387_i32 = arith.constant -1028477387 : i32
    %47 = vector.broadcast %c-1028477387_i32 : i32 to vector<8x128xi32>
    %48 = arith.muli %46, %47 : vector<8x128xi32>
    %c16_i32_5 = arith.constant 16 : i32
    %49 = vector.broadcast %c16_i32_5 : i32 to vector<8x128xi32>
    %50 = arith.shrui %48, %49 : vector<8x128xi32>
    %51 = arith.xori %48, %50 : vector<8x128xi32>
    %c8_i32 = arith.constant 8 : i32
    %52 = vector.broadcast %c8_i32 : i32 to vector<8x128xi32>
    %53 = arith.shrui %51, %52 : vector<8x128xi32>
    %54 = arith.uitofp %53 : vector<8x128xi32> to vector<8x128xf32>
    %cst = arith.constant 5.96046448E-6 : f32
    %55 = vector.broadcast %cst : f32 to vector<8x128xf32>
    %56 = arith.mulf %54, %55 : vector<8x128xf32>
    %c0_6 = arith.constant 0 : index
    %c0_7 = arith.constant 0 : index
    %57 = vector.load %arg3[%c0_6, %c0_7] : memref<128x128xf32, #tpu.memory_space<vmem>>, vector<128x128xf32>
    %cst_8 = arith.constant dense<0.000000e+00> : vector<8x128xf32>
    %58 = tpu.matmul %56, %57, %cst_8 {dimension_numbers = #tpu.dot_dimension_numbers<[1], [0], [0], [1], [0, 0, 1, 1], [], []>} : vector<8x128xf32>, vector<128x128xf32>, vector<8x128xf32> -> vector<8x128xf32>
    %c0_9 = arith.constant 0 : index
    %c0_10 = arith.constant 0 : index
    %59 = vector.load %arg4[%c0_9, %c0_10] : memref<1x128xf32, #tpu.memory_space<vmem>>, vector<1x128xf32>
    %60 = vector.broadcast %59 : vector<1x128xf32> to vector<8x128xf32>
    %61 = arith.addf %58, %60 : vector<8x128xf32>
    %c0_11 = arith.constant 0 : index
    %c0_12 = arith.constant 0 : index
    %62 = vector.load %arg5[%c0_11, %c0_12] : memref<8x128xf32, #tpu.memory_space<vmem>>, vector<8x128xf32>
    tpu.vector_store %arg5[%c0_11, %c0_12], %61 {strides = array<i32>} : memref<8x128xf32, #tpu.memory_space<vmem>>, vector<8x128xf32>,
    return
  }
  func.func @transform_0(%arg0: i32) -> (i32, i32) {
    %c0_i32 = arith.constant 0 : i32
    %c0_i32_0 = arith.constant 0 : i32
    return %arg0, %c0_i32 : i32, i32
  }
  func.func @transform_1(%arg0: i32) -> (i32, i32) {
    %c0_i32 = arith.constant 0 : i32
    %c0_i32_0 = arith.constant 0 : i32
    %c0_i32_1 = arith.constant 0 : i32
    return %c0_i32, %c0_i32_0 : i32, i32
  }
  func.func @transform_2(%arg0: i32) -> (i32, i32) {
    %c0_i32 = arith.constant 0 : i32
    %c0_i32_0 = arith.constant 0 : i32
    %c0_i32_1 = arith.constant 0 : i32
    return %c0_i32, %c0_i32_0 : i32, i32
  }
  func.func @transform_3(%arg0: i32) -> (i32, i32) {
    %c0_i32 = arith.constant 0 : i32
    %c0_i32_0 = arith.constant 0 : i32
    %c0_i32_1 = arith.constant 0 : i32
    return %c0_i32, %c0_i32_0 : i32, i32
  }
  func.func @transform_4(%arg0: i32) -> (i32, i32) {
    %c0_i32 = arith.constant 0 : i32
    %c0_i32_0 = arith.constant 0 : i32
    return %arg0, %c0_i32 : i32, i32
  }
}

</mosaic_0001>

<llo_original>
// kernel: tpu_custom_call.1
$region0: #{tpu_custom_call.1}
  #allocation0 [shape = 'u32[]', space=smem, size = 0x4, offset = 0x4, fixed_abs, tag = 'smem constant byte address 0x4 - core index']
  #allocation1 [shape = 'u32[144,128]{1,0:T(1,128)}', space=vmem, size = 0x12000, scoped, tag = 'internal scratch']
  %s0 = inlined_call_operand.hbm [shape: f32[4,4], index: 0, kind: input, shape index: {}]
  %s1 = inlined_call_operand.vmem [shape: u32[2,128], index: 1, kind: input, shape index: {}]
  %s2 = inlined_call_operand.hbm [shape: f32[128,128], index: 2, kind: input, shape index: {}]
  %s3 = inlined_call_operand.vmem [shape: f32[1,128], index: 3, kind: input, shape index: {}]
  %s4 = inlined_call_operand.hbm [shape: f32[4,128], index: 4, kind: output, shape index: {}]
  %s5 = sld [smem:[#allocation0]]
  $region34: #{tpu_custom_call.1} parent=0
    _
  %s7 = ssub.s32 1, %s5
  %s8 = scalar_select 0, %s7, %s5
  $region1: #{tpu_custom_call.1} parent=0
    #allocation2 [shape = 'u8[4096]{0}', space=vmem, size = 0x1000, scoped, tag = 'input window, operand 0, single buffered']
    #allocation3 [shape = 's32[1]{0}', space=sflag, size = 0x4, scoped, tag = 'scoped memory for tpu_custom_call.1']
    #allocation4 [shape = 's32[1]{0}', space=sflag, size = 0x4, scoped, tag = 'scoped memory for tpu_custom_call.1']
    #allocation5 [shape = 'u8[65536]{0}', space=vmem, size = 0x10000, scoped, tag = 'input window, operand 2, single buffered']
    #allocation6 [shape = 's32[1]{0}', space=sflag, size = 0x4, scoped, tag = 'scoped memory for tpu_custom_call.1']
    #allocation7 [shape = 'u8[4096]{0}', space=vmem, size = 0x1000, scoped, tag = 'output window, operand 0, single buffered']
    %9 = vsyncpa [#allocation3], 0
    %10 = vsyncpa [#allocation6], 0
    %11 = vsyncpa [#allocation4], 0
    // Predicated region
    $region2: #{tpu_custom_call.1} parent=1 // pred_check
      _
    $region3: #{tpu_custom_call.1} parent=1 // pred_check_branch
      %13 = sbr.rel (0) target = $region5
    $region4: #{tpu_custom_call.1} parent=1 // pred_region
      %s15 = ssub.s32 128, 64
      %16 = vsyncadd [#allocation3], %s15
      %s17 = sshll.u32 [#allocation2], 4
      %s18 = int_to_ptr.vmem [resolvable:$true] %s17
      %23 = dma.hbm_to_vmem [thread:$0]  %s0, 64, %s18, [#allocation3], 64, 64, 4
    $region5: #{tpu_custom_call.1} parent=1 // pred_fallthru
      _
    // Predicated region
    $region6: #{tpu_custom_call.1} parent=1 // pred_check
      _
    $region7: #{tpu_custom_call.1} parent=1 // pred_check_branch
      %25 = sbr.rel (0) target = $region9
    $region8: #{tpu_custom_call.1} parent=1 // pred_region
      _
    $region9: #{tpu_custom_call.1} parent=1 // pred_fallthru
      _
    // Predicated region
    $region10: #{tpu_custom_call.1} parent=1 // pred_check
      _
    $region11: #{tpu_custom_call.1} parent=1 // pred_check_branch
      %27 = sbr.rel (0) target = $region13
    $region12: #{tpu_custom_call.1} parent=1 // pred_region
      %s29 = ssub.s32 2048, 2048
      %30 = vsyncadd [#allocation6], %s29
      %s31 = sshll.u32 [#allocation5], 4
      %s32 = int_to_ptr.vmem [resolvable:$true] %s31
      %37 = dma.hbm_to_vmem [thread:$0]  %s2, 2048, %s32, [#allocation6], 128, 128, 8
    $region13: #{tpu_custom_call.1} parent=1 // pred_fallthru
      _
    // Predicated region
    $region14: #{tpu_custom_call.1} parent=1 // pred_check
      _
    $region15: #{tpu_custom_call.1} parent=1 // pred_check_branch
      %39 = sbr.rel (0) target = $region17
    $region16: #{tpu_custom_call.1} parent=1 // pred_region
      _
    $region17: #{tpu_custom_call.1} parent=1 // pred_fallthru
      _
    // Predicated region
    $region18: #{tpu_custom_call.1} parent=1 // pred_check
      _
    $region19: #{tpu_custom_call.1} parent=1 // pred_check_branch
      %41 = sbr.rel (0) target = $region21
    $region20: #{tpu_custom_call.1} parent=1 // pred_region
      %42 = dma.done [#allocation3], 128
    $region21: #{tpu_custom_call.1} parent=1 // pred_fallthru
      _
    // Predicated region
    $region22: #{tpu_custom_call.1} parent=1 // pred_check
      _
    $region23: #{tpu_custom_call.1} parent=1 // pred_check_branch
      %44 = sbr.rel (0) target = $region25
    $region24: #{tpu_custom_call.1} parent=1 // pred_region
      %45 = dma.done [#allocation6], 2048
    $region25: #{tpu_custom_call.1} parent=1 // pred_fallthru
      _
    %v46 = vld [vmem:[%s1] sm:$0x1]
    %v47 = vld [vmem:[%s1 + $0x1] sm:$0x1]
    %v48 = vld [vmem:[#allocation2] sm:$0xff]
    %vm50 = vcmp.eq.s32.totalorder %v48, 2147483648
    %v51 = vsel %vm50, 0, %v48
    %v52 = vmul.u32 %v51, 2654435761
    %vm53 = vcmp.le.u32.totalorder %v47, 2
    %v54 = vsel %vm53, 1, 0
    %v55 = vlaneseq
    %v56 = vshrl.u32 %v55, 7
    %v57 = vsub.s32 0, %v56
    %v58 = vrot.slane %v54, %v57
    %vm59 = vcmp.eq.s32.totalorder %v58, 1
    %60 = vset.pattern.permute.xlu0 2
    %61 = vperm.xlu0 %60, %v52
    %v62 = vpop.permute.xlu0 %61
    %63 = vset.pattern.permute.xlu0 3
    %64 = vperm.xlu0 %63, %v52
    %v65 = vpop.permute.xlu0 %64
    %v66 = vsel %vm59, %v62, %v65
    %vm67 = vcmp.le.u32.totalorder %v47, 1
    %v68 = vsel %vm67, 1, 0
    %v69 = vlaneseq
    %v70 = vshrl.u32 %v69, 7
    %v71 = vsub.s32 0, %v70
    %v72 = vrot.slane %v68, %v71
    %vm73 = vcmp.eq.s32.totalorder %v72, 1
    %74 = vset.pattern.permute.xlu0 1
    %75 = vperm.xlu0 %74, %v52
    %v76 = vpop.permute.xlu0 %75
    %v77 = vsel %vm73, %v76, %v66
    %vm78 = vcmp.le.u32.totalorder %v47, 0
    %v79 = vsel %vm78, 1, 0
    %v80 = vlaneseq
    %v81 = vshrl.u32 %v80, 7
    %v82 = vsub.s32 0, %v81
    %v83 = vrot.slane %v79, %v82
    %vm84 = vcmp.eq.s32.totalorder %v83, 1
    %85 = vset.pattern.permute.xlu0 0
    %86 = vperm.xlu0 %85, %v52
    %v87 = vpop.permute.xlu0 %86
    %v88 = vsel %vm84, %v87, %v77
    %v89 = vlaneseq
    %v90 = vshrl.u32 %v89, 7
    %v91 = vsub.s32 0, %v90
    %v92 = vrot.slane %v46, %v91
    %v93 = vadd.s32 %v88, %v92
    %v94 = vshrl.u32 %v93, 16
    %v95 = vxor.u32 %v93, %v94
    %v96 = vmul.u32 %v95, 2246822507
    %v97 = vshrl.u32 %v96, 13
    %v98 = vxor.u32 %v96, %v97
    %v99 = vmul.u32 %v98, 3266489909
    %v100 = vshrl.u32 %v99, 16
    %v101 = vxor.u32 %v99, %v100
    %v102 = vshrl.u32 %v101, 8
    %v103 = vshrl.u32 %v102, 16
    %v104 = vand.u32 %v102, 65535
    %v105 = vcvt.s32.f32 %v103
    %v106 = vmul.f32 %v105, 65536.0
    %v107 = vcvt.s32.f32 %v104
    %v108 = vadd.f32 %v106, %v107
    %v109 = vmul.f32 %v108, 5.9604645e-06
    %v110 = vld [vmem:[#allocation5] sm:$0xff]
    %v111 = vld [vmem:[#allocation5 + $0x8] sm:$0xff]
    %v112 = vld [vmem:[#allocation5 + $0x10] sm:$0xff]
    %v113 = vld [vmem:[#allocation5 + $0x18] sm:$0xff]
    %v114 = vld [vmem:[#allocation5 + $0x20] sm:$0xff]
    %v115 = vld [vmem:[#allocation5 + $0x28] sm:$0xff]
    %v116 = vld [vmem:[#allocation5 + $0x30] sm:$0xff]
    %v117 = vld [vmem:[#allocation5 + $0x38] sm:$0xff]
    %v118 = vld [vmem:[#allocation5 + $0x40] sm:$0xff]
    %v119 = vld [vmem:[#allocation5 + $0x48] sm:$0xff]
    %v120 = vld [vmem:[#allocation5 + $0x50] sm:$0xff]
    %v121 = vld [vmem:[#allocation5 + $0x58] sm:$0xff]
    %v122 = vld [vmem:[#allocation5 + $0x60] sm:$0xff]
    %v123 = vld [vmem:[#allocation5 + $0x68] sm:$0xff]
    %v124 = vld [vmem:[#allocation5 + $0x70] sm:$0xff]
    %v125 = vld [vmem:[#allocation5 + $0x78] sm:$0xff]
    %v126 = vld [vmem:[%s3] sm:$0x1]
    %v128 = vlaneseq
    %v129 = vshrl.u32 %v128, 7
    %v130 = vsub.s32 0, %v129
    %v131 = vrot.slane %v126, %v130
    %133 = vmatprep.subr.mxu0 0.0
    %134 = vmatpush1.msra.mxu0 %v110
    %135 = vmatprep.subr.mxu0 0.0
    %136 = vmatpush1.msra.mxu0 %v111
    %137 = vmatprep.subr.mxu0 0.0
    %138 = vmatpush1.msra.mxu0 %v112
    %139 = vmatprep.subr.mxu0 0.0
    %140 = vmatpush1.msra.mxu0 %v113
    %141 = vmatprep.subr.mxu0 0.0
    %142 = vmatpush1.msra.mxu0 %v114
    %143 = vmatprep.subr.mxu0 0.0
    %144 = vmatpush1.msra.mxu0 %v115
    %145 = vmatprep.subr.mxu0 0.0
    %146 = vmatpush1.msra.mxu0 %v116
    %147 = vmatprep.subr.mxu0 0.0
    %148 = vmatpush1.msra.mxu0 %v117
    %149 = vmatprep.subr.mxu0 0.0
    %150 = vmatpush1.msra.mxu0 %v118
    %151 = vmatprep.subr.mxu0 0.0
    %152 = vmatpush1.msra.mxu0 %v119
    %153 = vmatprep.subr.mxu0 0.0
    %154 = vmatpush1.msra.mxu0 %v120
    %155 = vmatprep.subr.mxu0 0.0
    %156 = vmatpush1.msra.mxu0 %v121
    %157 = vmatprep.subr.mxu0 0.0
    %158 = vmatpush1.msra.mxu0 %v122
    %159 = vmatprep.subr.mxu0 0.0
    %160 = vmatpush1.msra.mxu0 %v123
    %161 = vmatprep.subr.mxu0 0.0
    %162 = vmatpush1.msra.mxu0 %v124
    %163 = vmatprep.subr.mxu0 0.0
    %164 = vmatpush1.msra.mxu0 %v125
    %165 = vmatprep.subr.mxu0 0.0
    %166 = vmatpush1.msra.mxu0 0.0
    %167 = vmatprep.subr.mxu0 0.0
    %168 = vmatpush1.msra.mxu0 0.0
    %169 = vmatprep.subr.mxu0 0.0
    %170 = vmatpush1.msra.mxu0 0.0
    %171 = vmatprep.subr.mxu0 0.0
    %172 = vmatpush1.msra.mxu0 0.0
    %173 = vmatprep.subr.mxu0 0.0
    %174 = vmatpush1.msra.mxu0 0.0
    %175 = vmatprep.subr.mxu0 0.0
    %176 = vmatpush1.msra.mxu0 0.0
    %177 = vmatprep.subr.mxu0 0.0
    %178 = vmatpush1.msra.mxu0 0.0
    %179 = vmatprep.subr.mxu0 0.0
    %180 = vmatpush1.msra.mxu0 0.0
    %181 = vmatprep.subr.mxu0 0.0
    %182 = vmatpush1.msra.mxu0 0.0
    %183 = vmatprep.subr.mxu0 0.0
    %184 = vmatpush1.msra.mxu0 0.0
    %185 = vmatprep.subr.mxu0 0.0
    %186 = vmatpush1.msra.mxu0 0.0
    %187 = vmatprep.subr.mxu0 0.0
    %188 = vmatpush1.msra.mxu0 0.0
    %189 = vmatprep.subr.mxu0 0.0
    %190 = vmatpush1.msra.mxu0 0.0
    %191 = vmatprep.subr.mxu0 0.0
    %192 = vmatpush1.msra.mxu0 0.0
    %193 = vmatprep.subr.mxu0 0.0
    %194 = vmatpush1.msra.mxu0 0.0
    %195 = vmatprep.subr.mxu0 0.0
    %196 = vmatpush1.msra.mxu0 0.0
    %197 = vmatprep.mubr.f32.mxu0 0.0
    %198 = vmatmul.mubr.f32.gmra.mrb[0].mxu0 %v109
    %v199 = vpop.f32.mrb[0].mxu0
    %v200 = vadd.f32 %v131, %v199
    %v201 = vpop.f32.mrb[0].mxu0
    %202 = vdwg.mxu0
    %203 = vst [vmem:[#allocation7] sm:$0xff] %v200
    // Predicated region
    $region26: #{tpu_custom_call.1} parent=1 // pred_check
      _
    $region27: #{tpu_custom_call.1} parent=1 // pred_check_branch
      %205 = sbr.rel (0) target = $region29
    $region28: #{tpu_custom_call.1} parent=1 // pred_region
      %s207 = ssub.s32 128, 64
      %208 = vsyncadd [#allocation4], %s207
      %s209 = sshll.u32 [#allocation7], 4
      %s210 = int_to_ptr.vmem [resolvable:$true] %s209
      %215 = dma.vmem_to_hbm [thread:$0]  %s210, 64, %s4, [#allocation4], 64, 64, 4
    $region29: #{tpu_custom_call.1} parent=1 // pred_fallthru
      _
    // Predicated region
    $region30: #{tpu_custom_call.1} parent=1 // pred_check
      _
    $region31: #{tpu_custom_call.1} parent=1 // pred_check_branch
      %217 = sbr.rel (0) target = $region33
    $region32: #{tpu_custom_call.1} parent=1 // pred_region
      %218 = dma.done [#allocation4], 128
    $region33: #{tpu_custom_call.1} parent=1 // pred_fallthru
      _
    %219 = vsyncpa [#allocation3], 1
    %220 = vsyncpa [#allocation6], 1
    %221 = vsyncpa [#allocation4], 1

</llo_original>
